<compile_context>
chip_gen: v7x
topology: tpu7x:2x2x1
jax: 0.10.0
libtpu: 0.0.40
codegen_flags: <defaults>
</compile_context>

<pallas_src>
import jax
import jax.numpy as jnp
from jax.experimental import pallas as pl
from jax.experimental.pallas import tpu as pltpu


# ----------------------------------------------------------------------------
# Pallas kernel: 4-way max over the pool taps (lane-dense)
# ----------------------------------------------------------------------------
def _max4_kernel(x_ref, o_ref):
    # x_ref: (4, tl) -- rows are the 4 taps of each 2x2 window, lanes are the
    #                   flattened (N, C, Ho, Wo) output positions.
    # o_ref: (1, tl)
    x = x_ref[...]
    v0 = jnp.maximum(x[0:1, :], x[1:2, :])
    v1 = jnp.maximum(x[2:3, :], x[3:4, :])
    o_ref[...] = jnp.maximum(v0, v1)


def _pick_lane_tile(m, cap=32 * 1024):
    """Largest multiple of 128 that divides m (<= cap); fall back to full m.

    Keeps the lane (last) dim of every block a multiple of 128 (unmasked stores)
    while bounding the double-buffered VMEM footprint to ~cap * 5 * 4 B * 2.
    """
    best = m  # full-array block is always legal
    t = 128
    limit = min(m, cap)
    while t <= limit:
        if m % t == 0:
            best = t
        t += 128
    if m % 128 != 0:
        return m
    return best


def pallas_max4(taps):
    """taps: (4, M) float32 -> (1, M) float32, max over axis 0."""
    _, m = taps.shape
    tl = _pick_lane_tile(m)
    grid = (m // tl,)
    return pl.pallas_call(
        _max4_kernel,
        out_shape=jax.ShapeDtypeStruct((1, m), taps.dtype),
        grid_spec=pltpu.PrefetchScalarGridSpec(
            num_scalar_prefetch=0,
            grid=grid,
            in_specs=[pl.BlockSpec((4, tl), lambda i: (0, i))],
            out_specs=pl.BlockSpec((1, tl), lambda i: (0, i)),
        ),
        compiler_params=pltpu.CompilerParams(
            dimension_semantics=("parallel",),
        ),
    )(taps)


# ----------------------------------------------------------------------------
# Forward: MaxPool2d(kernel_size=2, stride=2, padding=0) on NCHW input
# ----------------------------------------------------------------------------
@jax.jit
def down_forward(x_nchw):
    n, c, h, w = x_nchw.shape
    ho, wo = h // 2, w // 2
    # padding=0 => odd trailing row/col is dropped (floor division), like PyTorch.
    x = x_nchw[:, :, : ho * 2, : wo * 2]
    # (N, C, Ho, 2, Wo, 2): pure reshape of contiguous NCHW (no data movement).
    x6 = x.reshape(n, c, ho, 2, wo, 2)
    # One XLA transpose (layout plumbing) -> taps leading, flattened output on lanes.
    taps = jnp.transpose(x6, (3, 5, 0, 1, 2, 4)).reshape(4, n * c * ho * wo)
    y = pallas_max4(taps)                      # (1, N*C*Ho*Wo), single Pallas call
    return y.reshape(n, c, ho, wo)


# ----------------------------------------------------------------------------
# Pure-JAX reference (independent path, for correctness check)
# ----------------------------------------------------------------------------
def ref_forward(x_nchw):
    return jax.lax.reduce_window(
        x_nchw,
        -jnp.inf,
        jax.lax.max,
        window_dimensions=(1, 1, 2, 2),
        window_strides=(1, 1, 2, 2),
        padding="VALID",
    )


# ----------------------------------------------------------------------------
# Main
# ----------------------------------------------------------------------------
if __name__ == "__main__":
    N, C, H, W = 2, 4, 16, 16

    key = jax.random.PRNGKey(0)
    x = jax.random.normal(key, (N, C, H, W), jnp.float32)

    out = jax.block_until_ready(down_forward(x))
    ref = jax.block_until_ready(ref_forward(x))

    assert out.shape == (N, C, H // 2, W // 2), (out.shape,)
    assert bool(jnp.array_equal(out, ref)), float(jnp.max(jnp.abs(out - ref)))

    print("KERNEL_OK")
</pallas_src>

<mosaic_0001>
module attributes {stable_mosaic.version = 11 : i64} {
  func.func @_max4_kernel(%arg0: i32, %arg1: memref<4x512xf32, #tpu.memory_space<vmem>>, %arg2: memref<1x512xf32, #tpu.memory_space<vmem>>) attributes {dimension_semantics = [#tpu.dimension_semantics<parallel>], iteration_bounds = array<i64: 1>, scalar_prefetch = 0 : i64, scratch_operands = 0 : i64, tpu.core_type = #tpu.core_type<tc>, window_params = [{transform_indices = @transform_0, window_bounds = array<i64: 4, 512>}, {transform_indices = @transform_1, window_bounds = array<i64: 1, 512>}]} {
    %c0 = arith.constant 0 : index
    %c0_0 = arith.constant 0 : index
    %0 = vector.load %arg1[%c0, %c0_0] : memref<4x512xf32, #tpu.memory_space<vmem>>, vector<4x512xf32>
    %1 = vector.extract_strided_slice %0 {offsets = [0, 0], sizes = [1, 512], strides = [1, 1]} : vector<4x512xf32> to vector<1x512xf32>
    %2 = vector.extract_strided_slice %0 {offsets = [1, 0], sizes = [1, 512], strides = [1, 1]} : vector<4x512xf32> to vector<1x512xf32>
    %3 = arith.maximumf %1, %2 : vector<1x512xf32>
    %4 = vector.extract_strided_slice %0 {offsets = [2, 0], sizes = [1, 512], strides = [1, 1]} : vector<4x512xf32> to vector<1x512xf32>
    %5 = vector.extract_strided_slice %0 {offsets = [3, 0], sizes = [1, 512], strides = [1, 1]} : vector<4x512xf32> to vector<1x512xf32>
    %6 = arith.maximumf %4, %5 : vector<1x512xf32>
    %7 = arith.maximumf %3, %6 : vector<1x512xf32>
    %c0_1 = arith.constant 0 : index
    %c0_2 = arith.constant 0 : index
    %8 = vector.load %arg2[%c0_1, %c0_2] : memref<1x512xf32, #tpu.memory_space<vmem>>, vector<1x512xf32>
    tpu.vector_store %arg2[%c0_1, %c0_2], %7 {strides = array<i32>} : memref<1x512xf32, #tpu.memory_space<vmem>>, vector<1x512xf32>,
    return
  }
  func.func @transform_0(%arg0: i32) -> (i32, i32) {
    %c0_i32 = arith.constant 0 : i32
    %c0_i32_0 = arith.constant 0 : i32
    return %c0_i32, %arg0 : i32, i32
  }
  func.func @transform_1(%arg0: i32) -> (i32, i32) {
    %c0_i32 = arith.constant 0 : i32
    %c0_i32_0 = arith.constant 0 : i32
    return %c0_i32, %arg0 : i32, i32
  }
}

</mosaic_0001>

<llo_original>
// kernel: down_forward.1
$region0: #{down_forward.1}
  #allocation0 [shape = 'u32[]', space=smem, size = 0x4, offset = 0x4, fixed_abs, tag = 'smem constant byte address 0x4 - core index']
  #allocation1 [shape = 'u32[144,128]{1,0:T(1,128)}', space=vmem, size = 0x12000, scoped, tag = 'internal scratch']
  %s0 = inlined_call_operand.vmem [shape: f32[4,512], index: 0, kind: input, shape index: {}]
  %s1 = inlined_call_operand.vmem [shape: f32[1,512], index: 1, kind: output, shape index: {}]
  %s2 = sld [smem:[#allocation0]]
  $region14: #{down_forward.1} parent=0
    _
  %s4 = ssub.s32 1, %s2
  %s5 = scalar_select 0, %s4, %s2
  // Predicated region
  $region2: #{down_forward.1} parent=0 // pred_check
    _
  $region3: #{down_forward.1} parent=0 // pred_check_branch
    %7 = sbr.rel (0) target = $region5
  $region4: #{down_forward.1} parent=0 // pred_region
    _
  $region5: #{down_forward.1} parent=0 // pred_fallthru
    _
  %v8 = vld [vmem:[%s0] sm:$0xff]
  %v9 = vld [vmem:[%s0 + $0x8] sm:$0xff]
  %v12 = vrot.slane %v8, 5
  %v13 = vrot.slane %v12, 4
  %v14 = vrot.slane %v9, 5
  %v15 = vrot.slane %v14, 4
  %v18 = vmax.f32 %v8, %v13
  %v19 = vmax.f32 %v9, %v15
  %v22 = vrot.slane %v18, 6
  %v23 = vrot.slane %v22, 4
  %v24 = vrot.slane %v19, 6
  %v25 = vrot.slane %v24, 4
  %v28 = vmax.f32 %v18, %v23
  %v29 = vmax.f32 %v19, %v25
  %v33 = vunpack.c.l.s4 1966171168
  %v34 = vunpack.c.0.s8 %v33
  %v35 = vlaneseq
  %v36 = vshrl.u32 %v35, 7
  %v37 = vsub.s32 %v34, %v36
  %v38 = vrot.slane %v28, %v37
  %v40 = vunpack.c.l.s4 1966171168
  %v41 = vunpack.c.0.s8 %v40
  %v42 = vlaneseq
  %v43 = vshrl.u32 %v42, 7
  %v44 = vsub.s32 %v41, %v43
  %v45 = vrot.slane %v29, %v44
  %v46 = vcombine.low %v38, %v45
  %v48 = vunpack.c.l.s4 1966171168
  %v49 = vunpack.c.0.s8 %v48
  %v50 = vlaneseq
  %v51 = vshrl.u32 %v50, 7
  %v52 = vsub.s32 %v49, %v51
  %v53 = vrot.slane %v46, %v52
  %v55 = vlaneseq
  %vm56 = vcmp.ge.s32.totalorder %v55, 0
  %vm57 = vcmp.lt.s32.totalorder %v55, 512
  %vm58 = vmand %vm56, %vm57
  %59 = vst.msk [vmem:[%s1] sm:$0xf] %vm58, %v53
  // Predicated region
  $region6: #{down_forward.1} parent=0 // pred_check
    _
  $region7: #{down_forward.1} parent=0 // pred_check_branch
    %61 = sbr.rel (0) target = $region9
  $region8: #{down_forward.1} parent=0 // pred_region
    _
  $region9: #{down_forward.1} parent=0 // pred_fallthru
    _
  // Predicated region
  $region10: #{down_forward.1} parent=0 // pred_check
    _
  $region11: #{down_forward.1} parent=0 // pred_check_branch
    %63 = sbr.rel (0) target = $region13
  $region12: #{down_forward.1} parent=0 // pred_region
    _
  $region13: #{down_forward.1} parent=0 // pred_fallthru
    _

</llo_original>
